<compile_context>
chip_gen: v7x
topology: tpu7x:2x2x1
jax: 0.10.0
libtpu: 0.0.40
codegen_flags: <defaults>
</compile_context>

<pallas_src>
import functools

import jax
import jax.numpy as jnp
from jax.experimental import pallas as pl
from jax.experimental.pallas import tpu as pltpu


def _concat_dma_kernel(*refs, plan, n_in):
    """Pure HBM->HBM concat.

    refs = (*in_hbm_refs, out_hbm_ref, sem_ref)
      in_hbm_refs[i] : (outer, size_i)  flattened (cat_dim_i * tail)
      out_hbm_ref    : (outer, total)
      sem_ref        : DMA semaphores, one per in-flight chunk.

    plan[p] is a static list of (input_idx, src_col_start, dst_col_start,
    width) chunk-copies executed by grid program p.  All slices are static,
    so every DMA descriptor is fully resolved at compile time.
    """
    in_refs = refs[:n_in]
    out_ref = refs[n_in]
    sem = refs[n_in + 1]
    pid = pl.program_id(0)

    for p, tasks in enumerate(plan):
        if not tasks:
            continue

        @pl.when(pid == p)
        def _(tasks=tasks):
            copies = []
            for slot, (i, s0, d0, w) in enumerate(tasks):
                cp = pltpu.make_async_copy(
                    in_refs[i].at[:, s0:s0 + w],
                    out_ref.at[:, d0:d0 + w],
                    sem.at[slot],
                )
                cp.start()
                copies.append(cp)
            # All chunk copies are in flight (they overlap on the DMA
            # engines); now wait for the ones this program issued.
            for cp in copies:
                cp.wait()


def _chunk_boundaries(sz, n_chunks, gran=128):
    """Split [0, sz) into <= n_chunks pieces; interior boundaries rounded
    down to a multiple of `gran` (lane width) so chunks stay lane-aligned."""
    if n_chunks <= 1 or sz <= gran:
        return [0, sz]
    bounds = [0]
    for j in range(1, n_chunks):
        b = (j * sz // n_chunks) // gran * gran
        if b > bounds[-1]:
            bounds.append(b)
    if bounds[-1] < sz:
        bounds.append(sz)
    return bounds


def concat_pallas(xs, dimension=1, *, grid_programs=2, chunks_per_program=4,
                  min_total_bytes=1 << 20, min_row_segment_bytes=512,
                  min_chunk_bytes=64 << 10):
    """Pallas equivalent of torch.cat(xs, dim=dimension).

    Works for any concat dim by flattening each input to
    (prod(dims_before), cat_dim_i * prod(dims_after)) and concatenating along
    the contiguous inner dimension via direct HBM->HBM DMA.  Small or
    tiny-row-segment concats fall back to jnp.concatenate (overhead-bound).
    """
    xs = list(xs)
    assert len(xs) >= 1
    nd = xs[0].ndim
    d = dimension % nd
    dtype = xs[0].dtype
    ref_shape = xs[0].shape
    for x in xs:
        assert x.ndim == nd and x.dtype == dtype
        assert x.shape[:d] == ref_shape[:d]
        assert x.shape[d + 1:] == ref_shape[d + 1:]

    outer = 1
    for s in ref_shape[:d]:
        outer *= int(s)
    tail = 1
    for s in ref_shape[d + 1:]:
        tail *= int(s)

    cat_sizes = tuple(int(x.shape[d]) for x in xs)
    sizes = tuple(c * tail for c in cat_sizes)   # flattened inner extents
    total = sum(sizes)
    itemsize = jnp.dtype(dtype).itemsize
    out_shape = tuple(ref_shape[:d]) + (sum(cat_sizes),) + tuple(ref_shape[d + 1:])

    # --- Dispatch gating: regimes where the DMA kernel is overhead-bound ---
    total_bytes = outer * total * itemsize
    tiny_total = total_bytes < min_total_bytes
    # With outer > 1 every destination row segment of input i is a strided
    # sub-512B write -> per-segment DMA overhead dominates; bail out.
    tiny_rows = outer > 1 and any(
        0 < sz * itemsize < min_row_segment_bytes for sz in sizes)
    if total == 0 or tiny_total or tiny_rows:
        return jnp.concatenate(xs, axis=d)

    # --- Build the static DMA plan ---------------------------------------
    # Free reshape on contiguous (default-layout) arrays: channel concat ==
    # inner-dim concat on the (outer, cat_dim * tail) view.
    xs_flat = []
    tasks = []   # (input_idx_in_xs_flat, src_col, dst_col, width)
    max_chunks = max(1, grid_programs * chunks_per_program)
    off = 0
    for x, sz in zip(xs, sizes):
        if sz == 0:                      # skip zero-length members entirely
            continue
        idx = len(xs_flat)
        xs_flat.append(x.reshape(outer, sz))
        n_chunks = int(max(1, min(max_chunks,
                                  (sz * itemsize) // max(1, min_chunk_bytes))))
        bounds = _chunk_boundaries(sz, n_chunks)
        for c0, c1 in zip(bounds[:-1], bounds[1:]):
            tasks.append((idx, c0, off + c0, c1 - c0))
        off += sz

    # Round-robin chunks over grid programs: shards DMA-issue work across
    # v7x's two TensorCores; a cheap 2-step loop on single-core chips.
    plan = [tasks[p::grid_programs] for p in range(grid_programs)]
    max_tasks = max(1, max(len(t) for t in plan))

    out_flat = pl.pallas_call(
        functools.partial(_concat_dma_kernel, plan=plan, n_in=len(xs_flat)),
        out_shape=jax.ShapeDtypeStruct((outer, total), dtype),
        grid=(grid_programs,),
        # Everything stays in HBM; the kernel only drives DMA engines.
        in_specs=[pl.BlockSpec(memory_space=pl.ANY)] * len(xs_flat),
        out_specs=pl.BlockSpec(memory_space=pl.ANY),
        scratch_shapes=[pltpu.SemaphoreType.DMA((max_tasks,))],
        compiler_params=pltpu.CompilerParams(
            dimension_semantics=("parallel",)),
        cost_estimate=pl.CostEstimate(
            flops=0, transcendentals=0,
            bytes_accessed=2 * total_bytes),
    )(*xs_flat)

    return out_flat.reshape(out_shape)


if __name__ == "__main__":
    key = jax.random.PRNGKey(0)
    k1, k2, k3, k4, k5 = jax.random.split(key, 5)

    # 1) Small YOLO-neck-style concat: routed through the overhead-avoiding
    #    jnp.concatenate fallback (36 KB total is launch-overhead-bound).
    s1 = jax.random.normal(k1, (2, 4, 16, 16), dtype=jnp.float32)
    s2 = jax.random.normal(k2, (2, 6, 16, 16), dtype=jnp.float32)
    small = jax.block_until_ready(concat_pallas([s1, s2], dimension=1))
    small_ref = jnp.concatenate([s1, s2], axis=1)
    assert small.shape == small_ref.shape == (2, 10, 16, 16)
    assert jnp.array_equal(small, small_ref)

    # 2) Larger concat: exercises the Pallas HBM->HBM DMA kernel path
    #    (2 MiB output, >256 KiB per row segment, chunked + 2-program grid).
    x1 = jax.random.normal(k3, (2, 64, 32, 32), dtype=jnp.float32)
    x2 = jax.random.normal(k4, (2, 64, 32, 32), dtype=jnp.float32)
    x3 = jax.random.normal(k5, (2, 128, 32, 32), dtype=jnp.float32)
    out = jax.block_until_ready(concat_pallas([x1, x2, x3], dimension=1))
    ref = jnp.concatenate([x1, x2, x3], axis=1)
    assert out.shape == ref.shape == (2, 256, 32, 32)
    assert jnp.array_equal(out, ref)

    print("KERNEL_OK")
</pallas_src>

<mosaic_0001>
module attributes {stable_mosaic.version = 11 : i64} {
  func.func @_concat_dma_kernel(%arg0: i32, %arg1: memref<2x65536xf32, #tpu.memory_space<any>>, %arg2: memref<2x65536xf32, #tpu.memory_space<any>>, %arg3: memref<2x131072xf32, #tpu.memory_space<any>>, %arg4: memref<2x262144xf32, #tpu.memory_space<any>>, %arg5: memref<8x!tpu.dma_semaphore, #tpu.memory_space<semaphore_mem>>) attributes {dimension_semantics = [#tpu.dimension_semantics<parallel>], iteration_bounds = array<i64: 2>, scalar_prefetch = 0 : i64, scratch_operands = 1 : i64, tpu.core_type = #tpu.core_type<tc>, window_params = [{}, {}, {}, {}]} {
    %c0_i32 = arith.constant 0 : i32
    %0 = arith.cmpi eq, %arg0, %c0_i32 : i32
    %1 = arith.extui %0 : i1 to i32
    %c0_i32_0 = arith.constant 0 : i32
    %2 = arith.cmpi ne, %1, %c0_i32_0 : i32
    scf.if %2 {
      %c0_i32_2 = arith.constant 0 : i32
      %c0_i32_3 = arith.constant 0 : i32
      %c0_i32_4 = arith.constant 0 : i32
      %6 = tpu.memref_slice %arg1[%c0_i32_3, %c0_i32_4] : memref<2x65536xf32, #tpu.memory_space<any>> -> memref<2x16384xf32, #tpu.memory_space<any>>
      %c0_i32_5 = arith.constant 0 : i32
      %c0_i32_6 = arith.constant 0 : i32
      %7 = tpu.memref_slice %arg4[%c0_i32_5, %c0_i32_6] : memref<2x262144xf32, #tpu.memory_space<any>> -> memref<2x16384xf32, #tpu.memory_space<any>>
      %8 = tpu.memref_slice %arg5[%c0_i32_2] : memref<8x!tpu.dma_semaphore, #tpu.memory_space<semaphore_mem>> -> memref<1x!tpu.dma_semaphore, #tpu.memory_space<semaphore_mem>>
      %9 = tpu.memref_squeeze %8 : memref<1x!tpu.dma_semaphore, #tpu.memory_space<semaphore_mem>> -> memref<!tpu.dma_semaphore, #tpu.memory_space<semaphore_mem>>
      tpu.enqueue_dma source(%6 : memref<2x16384xf32, #tpu.memory_space<any>>) target(%7 : memref<2x16384xf32, #tpu.memory_space<any>>) target_semaphore(%9 : memref<!tpu.dma_semaphore, #tpu.memory_space<semaphore_mem>>)
      %c1_i32_7 = arith.constant 1 : i32
      %c0_i32_8 = arith.constant 0 : i32
      %c32768_i32 = arith.constant 32768 : i32
      %10 = tpu.memref_slice %arg1[%c0_i32_8, %c32768_i32] : memref<2x65536xf32, #tpu.memory_space<any>> -> memref<2x16384xf32, #tpu.memory_space<any>>
      %c0_i32_9 = arith.constant 0 : i32
      %c32768_i32_10 = arith.constant 32768 : i32
      %11 = tpu.memref_slice %arg4[%c0_i32_9, %c32768_i32_10] : memref<2x262144xf32, #tpu.memory_space<any>> -> memref<2x16384xf32, #tpu.memory_space<any>>
      %12 = tpu.memref_slice %arg5[%c1_i32_7] : memref<8x!tpu.dma_semaphore, #tpu.memory_space<semaphore_mem>> -> memref<1x!tpu.dma_semaphore, #tpu.memory_space<semaphore_mem>>
      %13 = tpu.memref_squeeze %12 : memref<1x!tpu.dma_semaphore, #tpu.memory_space<semaphore_mem>> -> memref<!tpu.dma_semaphore, #tpu.memory_space<semaphore_mem>>
      tpu.enqueue_dma source(%10 : memref<2x16384xf32, #tpu.memory_space<any>>) target(%11 : memref<2x16384xf32, #tpu.memory_space<any>>) target_semaphore(%13 : memref<!tpu.dma_semaphore, #tpu.memory_space<semaphore_mem>>)
      %c2_i32 = arith.constant 2 : i32
      %c0_i32_11 = arith.constant 0 : i32
      %c0_i32_12 = arith.constant 0 : i32
      %14 = tpu.memref_slice %arg2[%c0_i32_11, %c0_i32_12] : memref<2x65536xf32, #tpu.memory_space<any>> -> memref<2x16384xf32, #tpu.memory_space<any>>
      %c0_i32_13 = arith.constant 0 : i32
      %c65536_i32 = arith.constant 65536 : i32
      %15 = tpu.memref_slice %arg4[%c0_i32_13, %c65536_i32] : memref<2x262144xf32, #tpu.memory_space<any>> -> memref<2x16384xf32, #tpu.memory_space<any>>
      %16 = tpu.memref_slice %arg5[%c2_i32] : memref<8x!tpu.dma_semaphore, #tpu.memory_space<semaphore_mem>> -> memref<1x!tpu.dma_semaphore, #tpu.memory_space<semaphore_mem>>
      %17 = tpu.memref_squeeze %16 : memref<1x!tpu.dma_semaphore, #tpu.memory_space<semaphore_mem>> -> memref<!tpu.dma_semaphore, #tpu.memory_space<semaphore_mem>>
      tpu.enqueue_dma source(%14 : memref<2x16384xf32, #tpu.memory_space<any>>) target(%15 : memref<2x16384xf32, #tpu.memory_space<any>>) target_semaphore(%17 : memref<!tpu.dma_semaphore, #tpu.memory_space<semaphore_mem>>)
      %c3_i32 = arith.constant 3 : i32
      %c0_i32_14 = arith.constant 0 : i32
      %c32768_i32_15 = arith.constant 32768 : i32
      %18 = tpu.memref_slice %arg2[%c0_i32_14, %c32768_i32_15] : memref<2x65536xf32, #tpu.memory_space<any>> -> memref<2x16384xf32, #tpu.memory_space<any>>
      %c0_i32_16 = arith.constant 0 : i32
      %c98304_i32 = arith.constant 98304 : i32
      %19 = tpu.memref_slice %arg4[%c0_i32_16, %c98304_i32] : memref<2x262144xf32, #tpu.memory_space<any>> -> memref<2x16384xf32, #tpu.memory_space<any>>
      %20 = tpu.memref_slice %arg5[%c3_i32] : memref<8x!tpu.dma_semaphore, #tpu.memory_space<semaphore_mem>> -> memref<1x!tpu.dma_semaphore, #tpu.memory_space<semaphore_mem>>
      %21 = tpu.memref_squeeze %20 : memref<1x!tpu.dma_semaphore, #tpu.memory_space<semaphore_mem>> -> memref<!tpu.dma_semaphore, #tpu.memory_space<semaphore_mem>>
      tpu.enqueue_dma source(%18 : memref<2x16384xf32, #tpu.memory_space<any>>) target(%19 : memref<2x16384xf32, #tpu.memory_space<any>>) target_semaphore(%21 : memref<!tpu.dma_semaphore, #tpu.memory_space<semaphore_mem>>)
      %c4_i32 = arith.constant 4 : i32
      %c0_i32_17 = arith.constant 0 : i32
      %c0_i32_18 = arith.constant 0 : i32
      %22 = tpu.memref_slice %arg3[%c0_i32_17, %c0_i32_18] : memref<2x131072xf32, #tpu.memory_space<any>> -> memref<2x16384xf32, #tpu.memory_space<any>>
      %c0_i32_19 = arith.constant 0 : i32
      %c131072_i32 = arith.constant 131072 : i32
      %23 = tpu.memref_slice %arg4[%c0_i32_19, %c131072_i32] : memref<2x262144xf32, #tpu.memory_space<any>> -> memref<2x16384xf32, #tpu.memory_space<any>>
      %24 = tpu.memref_slice %arg5[%c4_i32] : memref<8x!tpu.dma_semaphore, #tpu.memory_space<semaphore_mem>> -> memref<1x!tpu.dma_semaphore, #tpu.memory_space<semaphore_mem>>
      %25 = tpu.memref_squeeze %24 : memref<1x!tpu.dma_semaphore, #tpu.memory_space<semaphore_mem>> -> memref<!tpu.dma_semaphore, #tpu.memory_space<semaphore_mem>>
      tpu.enqueue_dma source(%22 : memref<2x16384xf32, #tpu.memory_space<any>>) target(%23 : memref<2x16384xf32, #tpu.memory_space<any>>) target_semaphore(%25 : memref<!tpu.dma_semaphore, #tpu.memory_space<semaphore_mem>>)
      %c5_i32 = arith.constant 5 : i32
      %c0_i32_20 = arith.constant 0 : i32
      %c32768_i32_21 = arith.constant 32768 : i32
      %26 = tpu.memref_slice %arg3[%c0_i32_20, %c32768_i32_21] : memref<2x131072xf32, #tpu.memory_space<any>> -> memref<2x16384xf32, #tpu.memory_space<any>>
      %c0_i32_22 = arith.constant 0 : i32
      %c163840_i32 = arith.constant 163840 : i32
      %27 = tpu.memref_slice %arg4[%c0_i32_22, %c163840_i32] : memref<2x262144xf32, #tpu.memory_space<any>> -> memref<2x16384xf32, #tpu.memory_space<any>>
      %28 = tpu.memref_slice %arg5[%c5_i32] : memref<8x!tpu.dma_semaphore, #tpu.memory_space<semaphore_mem>> -> memref<1x!tpu.dma_semaphore, #tpu.memory_space<semaphore_mem>>
      %29 = tpu.memref_squeeze %28 : memref<1x!tpu.dma_semaphore, #tpu.memory_space<semaphore_mem>> -> memref<!tpu.dma_semaphore, #tpu.memory_space<semaphore_mem>>
      tpu.enqueue_dma source(%26 : memref<2x16384xf32, #tpu.memory_space<any>>) target(%27 : memref<2x16384xf32, #tpu.memory_space<any>>) target_semaphore(%29 : memref<!tpu.dma_semaphore, #tpu.memory_space<semaphore_mem>>)
      %c6_i32 = arith.constant 6 : i32
      %c0_i32_23 = arith.constant 0 : i32
      %c65536_i32_24 = arith.constant 65536 : i32
      %30 = tpu.memref_slice %arg3[%c0_i32_23, %c65536_i32_24] : memref<2x131072xf32, #tpu.memory_space<any>> -> memref<2x16384xf32, #tpu.memory_space<any>>
      %c0_i32_25 = arith.constant 0 : i32
      %c196608_i32 = arith.constant 196608 : i32
      %31 = tpu.memref_slice %arg4[%c0_i32_25, %c196608_i32] : memref<2x262144xf32, #tpu.memory_space<any>> -> memref<2x16384xf32, #tpu.memory_space<any>>
      %32 = tpu.memref_slice %arg5[%c6_i32] : memref<8x!tpu.dma_semaphore, #tpu.memory_space<semaphore_mem>> -> memref<1x!tpu.dma_semaphore, #tpu.memory_space<semaphore_mem>>
      %33 = tpu.memref_squeeze %32 : memref<1x!tpu.dma_semaphore, #tpu.memory_space<semaphore_mem>> -> memref<!tpu.dma_semaphore, #tpu.memory_space<semaphore_mem>>
      tpu.enqueue_dma source(%30 : memref<2x16384xf32, #tpu.memory_space<any>>) target(%31 : memref<2x16384xf32, #tpu.memory_space<any>>) target_semaphore(%33 : memref<!tpu.dma_semaphore, #tpu.memory_space<semaphore_mem>>)
      %c7_i32 = arith.constant 7 : i32
      %c0_i32_26 = arith.constant 0 : i32
      %c98304_i32_27 = arith.constant 98304 : i32
      %34 = tpu.memref_slice %arg3[%c0_i32_26, %c98304_i32_27] : memref<2x131072xf32, #tpu.memory_space<any>> -> memref<2x16384xf32, #tpu.memory_space<any>>
      %c0_i32_28 = arith.constant 0 : i32
      %c229376_i32 = arith.constant 229376 : i32
      %35 = tpu.memref_slice %arg4[%c0_i32_28, %c229376_i32] : memref<2x262144xf32, #tpu.memory_space<any>> -> memref<2x16384xf32, #tpu.memory_space<any>>
      %36 = tpu.memref_slice %arg5[%c7_i32] : memref<8x!tpu.dma_semaphore, #tpu.memory_space<semaphore_mem>> -> memref<1x!tpu.dma_semaphore, #tpu.memory_space<semaphore_mem>>
      %37 = tpu.memref_squeeze %36 : memref<1x!tpu.dma_semaphore, #tpu.memory_space<semaphore_mem>> -> memref<!tpu.dma_semaphore, #tpu.memory_space<semaphore_mem>>
      tpu.enqueue_dma source(%34 : memref<2x16384xf32, #tpu.memory_space<any>>) target(%35 : memref<2x16384xf32, #tpu.memory_space<any>>) target_semaphore(%37 : memref<!tpu.dma_semaphore, #tpu.memory_space<semaphore_mem>>)
      %c0_i32_29 = arith.constant 0 : i32
      %c0_i32_30 = arith.constant 0 : i32
      %c0_i32_31 = arith.constant 0 : i32
      %38 = tpu.memref_slice %arg1[%c0_i32_30, %c0_i32_31] : memref<2x65536xf32, #tpu.memory_space<any>> -> memref<2x16384xf32, #tpu.memory_space<any>>
      %c0_i32_32 = arith.constant 0 : i32
      %c0_i32_33 = arith.constant 0 : i32
      %39 = tpu.memref_slice %arg4[%c0_i32_32, %c0_i32_33] : memref<2x262144xf32, #tpu.memory_space<any>> -> memref<2x16384xf32, #tpu.memory_space<any>>
      %40 = tpu.memref_slice %arg5[%c0_i32_29] : memref<8x!tpu.dma_semaphore, #tpu.memory_space<semaphore_mem>> -> memref<1x!tpu.dma_semaphore, #tpu.memory_space<semaphore_mem>>
      %41 = tpu.memref_squeeze %40 : memref<1x!tpu.dma_semaphore, #tpu.memory_space<semaphore_mem>> -> memref<!tpu.dma_semaphore, #tpu.memory_space<semaphore_mem>>
      tpu.wait_dma2 semaphore(%41 : memref<!tpu.dma_semaphore, #tpu.memory_space<semaphore_mem>>) src(%38 : memref<2x16384xf32, #tpu.memory_space<any>>) dst(%39 : memref<2x16384xf32, #tpu.memory_space<any>>)
      %c1_i32_34 = arith.constant 1 : i32
      %c0_i32_35 = arith.constant 0 : i32
      %c32768_i32_36 = arith.constant 32768 : i32
      %42 = tpu.memref_slice %arg1[%c0_i32_35, %c32768_i32_36] : memref<2x65536xf32, #tpu.memory_space<any>> -> memref<2x16384xf32, #tpu.memory_space<any>>
      %c0_i32_37 = arith.constant 0 : i32
      %c32768_i32_38 = arith.constant 32768 : i32
      %43 = tpu.memref_slice %arg4[%c0_i32_37, %c32768_i32_38] : memref<2x262144xf32, #tpu.memory_space<any>> -> memref<2x16384xf32, #tpu.memory_space<any>>
      %44 = tpu.memref_slice %arg5[%c1_i32_34] : memref<8x!tpu.dma_semaphore, #tpu.memory_space<semaphore_mem>> -> memref<1x!tpu.dma_semaphore, #tpu.memory_space<semaphore_mem>>
      %45 = tpu.memref_squeeze %44 : memref<1x!tpu.dma_semaphore, #tpu.memory_space<semaphore_mem>> -> memref<!tpu.dma_semaphore, #tpu.memory_space<semaphore_mem>>
      tpu.wait_dma2 semaphore(%45 : memref<!tpu.dma_semaphore, #tpu.memory_space<semaphore_mem>>) src(%42 : memref<2x16384xf32, #tpu.memory_space<any>>) dst(%43 : memref<2x16384xf32, #tpu.memory_space<any>>)
      %c2_i32_39 = arith.constant 2 : i32
      %c0_i32_40 = arith.constant 0 : i32
      %c0_i32_41 = arith.constant 0 : i32
      %46 = tpu.memref_slice %arg2[%c0_i32_40, %c0_i32_41] : memref<2x65536xf32, #tpu.memory_space<any>> -> memref<2x16384xf32, #tpu.memory_space<any>>
      %c0_i32_42 = arith.constant 0 : i32
      %c65536_i32_43 = arith.constant 65536 : i32
      %47 = tpu.memref_slice %arg4[%c0_i32_42, %c65536_i32_43] : memref<2x262144xf32, #tpu.memory_space<any>> -> memref<2x16384xf32, #tpu.memory_space<any>>
      %48 = tpu.memref_slice %arg5[%c2_i32_39] : memref<8x!tpu.dma_semaphore, #tpu.memory_space<semaphore_mem>> -> memref<1x!tpu.dma_semaphore, #tpu.memory_space<semaphore_mem>>
      %49 = tpu.memref_squeeze %48 : memref<1x!tpu.dma_semaphore, #tpu.memory_space<semaphore_mem>> -> memref<!tpu.dma_semaphore, #tpu.memory_space<semaphore_mem>>
      tpu.wait_dma2 semaphore(%49 : memref<!tpu.dma_semaphore, #tpu.memory_space<semaphore_mem>>) src(%46 : memref<2x16384xf32, #tpu.memory_space<any>>) dst(%47 : memref<2x16384xf32, #tpu.memory_space<any>>)
      %c3_i32_44 = arith.constant 3 : i32
      %c0_i32_45 = arith.constant 0 : i32
      %c32768_i32_46 = arith.constant 32768 : i32
      %50 = tpu.memref_slice %arg2[%c0_i32_45, %c32768_i32_46] : memref<2x65536xf32, #tpu.memory_space<any>> -> memref<2x16384xf32, #tpu.memory_space<any>>
      %c0_i32_47 = arith.constant 0 : i32
      %c98304_i32_48 = arith.constant 98304 : i32
      %51 = tpu.memref_slice %arg4[%c0_i32_47, %c98304_i32_48] : memref<2x262144xf32, #tpu.memory_space<any>> -> memref<2x16384xf32, #tpu.memory_space<any>>
      %52 = tpu.memref_slice %arg5[%c3_i32_44] : memref<8x!tpu.dma_semaphore, #tpu.memory_space<semaphore_mem>> -> memref<1x!tpu.dma_semaphore, #tpu.memory_space<semaphore_mem>>
      %53 = tpu.memref_squeeze %52 : memref<1x!tpu.dma_semaphore, #tpu.memory_space<semaphore_mem>> -> memref<!tpu.dma_semaphore, #tpu.memory_space<semaphore_mem>>
      tpu.wait_dma2 semaphore(%53 : memref<!tpu.dma_semaphore, #tpu.memory_space<semaphore_mem>>) src(%50 : memref<2x16384xf32, #tpu.memory_space<any>>) dst(%51 : memref<2x16384xf32, #tpu.memory_space<any>>)
      %c4_i32_49 = arith.constant 4 : i32
      %c0_i32_50 = arith.constant 0 : i32
      %c0_i32_51 = arith.constant 0 : i32
      %54 = tpu.memref_slice %arg3[%c0_i32_50, %c0_i32_51] : memref<2x131072xf32, #tpu.memory_space<any>> -> memref<2x16384xf32, #tpu.memory_space<any>>
      %c0_i32_52 = arith.constant 0 : i32
      %c131072_i32_53 = arith.constant 131072 : i32
      %55 = tpu.memref_slice %arg4[%c0_i32_52, %c131072_i32_53] : memref<2x262144xf32, #tpu.memory_space<any>> -> memref<2x16384xf32, #tpu.memory_space<any>>
      %56 = tpu.memref_slice %arg5[%c4_i32_49] : memref<8x!tpu.dma_semaphore, #tpu.memory_space<semaphore_mem>> -> memref<1x!tpu.dma_semaphore, #tpu.memory_space<semaphore_mem>>
      %57 = tpu.memref_squeeze %56 : memref<1x!tpu.dma_semaphore, #tpu.memory_space<semaphore_mem>> -> memref<!tpu.dma_semaphore, #tpu.memory_space<semaphore_mem>>
      tpu.wait_dma2 semaphore(%57 : memref<!tpu.dma_semaphore, #tpu.memory_space<semaphore_mem>>) src(%54 : memref<2x16384xf32, #tpu.memory_space<any>>) dst(%55 : memref<2x16384xf32, #tpu.memory_space<any>>)
      %c5_i32_54 = arith.constant 5 : i32
      %c0_i32_55 = arith.constant 0 : i32
      %c32768_i32_56 = arith.constant 32768 : i32
      %58 = tpu.memref_slice %arg3[%c0_i32_55, %c32768_i32_56] : memref<2x131072xf32, #tpu.memory_space<any>> -> memref<2x16384xf32, #tpu.memory_space<any>>
      %c0_i32_57 = arith.constant 0 : i32
      %c163840_i32_58 = arith.constant 163840 : i32
      %59 = tpu.memref_slice %arg4[%c0_i32_57, %c163840_i32_58] : memref<2x262144xf32, #tpu.memory_space<any>> -> memref<2x16384xf32, #tpu.memory_space<any>>
      %60 = tpu.memref_slice %arg5[%c5_i32_54] : memref<8x!tpu.dma_semaphore, #tpu.memory_space<semaphore_mem>> -> memref<1x!tpu.dma_semaphore, #tpu.memory_space<semaphore_mem>>
      %61 = tpu.memref_squeeze %60 : memref<1x!tpu.dma_semaphore, #tpu.memory_space<semaphore_mem>> -> memref<!tpu.dma_semaphore, #tpu.memory_space<semaphore_mem>>
      tpu.wait_dma2 semaphore(%61 : memref<!tpu.dma_semaphore, #tpu.memory_space<semaphore_mem>>) src(%58 : memref<2x16384xf32, #tpu.memory_space<any>>) dst(%59 : memref<2x16384xf32, #tpu.memory_space<any>>)
      %c6_i32_59 = arith.constant 6 : i32
      %c0_i32_60 = arith.constant 0 : i32
      %c65536_i32_61 = arith.constant 65536 : i32
      %62 = tpu.memref_slice %arg3[%c0_i32_60, %c65536_i32_61] : memref<2x131072xf32, #tpu.memory_space<any>> -> memref<2x16384xf32, #tpu.memory_space<any>>
      %c0_i32_62 = arith.constant 0 : i32
      %c196608_i32_63 = arith.constant 196608 : i32
      %63 = tpu.memref_slice %arg4[%c0_i32_62, %c196608_i32_63] : memref<2x262144xf32, #tpu.memory_space<any>> -> memref<2x16384xf32, #tpu.memory_space<any>>
      %64 = tpu.memref_slice %arg5[%c6_i32_59] : memref<8x!tpu.dma_semaphore, #tpu.memory_space<semaphore_mem>> -> memref<1x!tpu.dma_semaphore, #tpu.memory_space<semaphore_mem>>
      %65 = tpu.memref_squeeze %64 : memref<1x!tpu.dma_semaphore, #tpu.memory_space<semaphore_mem>> -> memref<!tpu.dma_semaphore, #tpu.memory_space<semaphore_mem>>
      tpu.wait_dma2 semaphore(%65 : memref<!tpu.dma_semaphore, #tpu.memory_space<semaphore_mem>>) src(%62 : memref<2x16384xf32, #tpu.memory_space<any>>) dst(%63 : memref<2x16384xf32, #tpu.memory_space<any>>)
      %c7_i32_64 = arith.constant 7 : i32
      %c0_i32_65 = arith.constant 0 : i32
      %c98304_i32_66 = arith.constant 98304 : i32
      %66 = tpu.memref_slice %arg3[%c0_i32_65, %c98304_i32_66] : memref<2x131072xf32, #tpu.memory_space<any>> -> memref<2x16384xf32, #tpu.memory_space<any>>
      %c0_i32_67 = arith.constant 0 : i32
      %c229376_i32_68 = arith.constant 229376 : i32
      %67 = tpu.memref_slice %arg4[%c0_i32_67, %c229376_i32_68] : memref<2x262144xf32, #tpu.memory_space<any>> -> memref<2x16384xf32, #tpu.memory_space<any>>
      %68 = tpu.memref_slice %arg5[%c7_i32_64] : memref<8x!tpu.dma_semaphore, #tpu.memory_space<semaphore_mem>> -> memref<1x!tpu.dma_semaphore, #tpu.memory_space<semaphore_mem>>
      %69 = tpu.memref_squeeze %68 : memref<1x!tpu.dma_semaphore, #tpu.memory_space<semaphore_mem>> -> memref<!tpu.dma_semaphore, #tpu.memory_space<semaphore_mem>>
      tpu.wait_dma2 semaphore(%69 : memref<!tpu.dma_semaphore, #tpu.memory_space<semaphore_mem>>) src(%66 : memref<2x16384xf32, #tpu.memory_space<any>>) dst(%67 : memref<2x16384xf32, #tpu.memory_space<any>>)
    } else {
    }
    %c1_i32 = arith.constant 1 : i32
    %3 = arith.cmpi eq, %arg0, %c1_i32 : i32
    %4 = arith.extui %3 : i1 to i32
    %c0_i32_1 = arith.constant 0 : i32
    %5 = arith.cmpi ne, %4, %c0_i32_1 : i32
    scf.if %5 {
      %c0_i32_2 = arith.constant 0 : i32
      %c0_i32_3 = arith.constant 0 : i32
      %c16384_i32 = arith.constant 16384 : i32
      %6 = tpu.memref_slice %arg1[%c0_i32_3, %c16384_i32] : memref<2x65536xf32, #tpu.memory_space<any>> -> memref<2x16384xf32, #tpu.memory_space<any>>
      %c0_i32_4 = arith.constant 0 : i32
      %c16384_i32_5 = arith.constant 16384 : i32
      %7 = tpu.memref_slice %arg4[%c0_i32_4, %c16384_i32_5] : memref<2x262144xf32, #tpu.memory_space<any>> -> memref<2x16384xf32, #tpu.memory_space<any>>
      %8 = tpu.memref_slice %arg5[%c0_i32_2] : memref<8x!tpu.dma_semaphore, #tpu.memory_space<semaphore_mem>> -> memref<1x!tpu.dma_semaphore, #tpu.memory_space<semaphore_mem>>
      %9 = tpu.memref_squeeze %8 : memref<1x!tpu.dma_semaphore, #tpu.memory_space<semaphore_mem>> -> memref<!tpu.dma_semaphore, #tpu.memory_space<semaphore_mem>>
      tpu.enqueue_dma source(%6 : memref<2x16384xf32, #tpu.memory_space<any>>) target(%7 : memref<2x16384xf32, #tpu.memory_space<any>>) target_semaphore(%9 : memref<!tpu.dma_semaphore, #tpu.memory_space<semaphore_mem>>)
      %c1_i32_6 = arith.constant 1 : i32
      %c0_i32_7 = arith.constant 0 : i32
      %c49152_i32 = arith.constant 49152 : i32
      %10 = tpu.memref_slice %arg1[%c0_i32_7, %c49152_i32] : memref<2x65536xf32, #tpu.memory_space<any>> -> memref<2x16384xf32, #tpu.memory_space<any>>
      %c0_i32_8 = arith.constant 0 : i32
      %c49152_i32_9 = arith.constant 49152 : i32
      %11 = tpu.memref_slice %arg4[%c0_i32_8, %c49152_i32_9] : memref<2x262144xf32, #tpu.memory_space<any>> -> memref<2x16384xf32, #tpu.memory_space<any>>
      %12 = tpu.memref_slice %arg5[%c1_i32_6] : memref<8x!tpu.dma_semaphore, #tpu.memory_space<semaphore_mem>> -> memref<1x!tpu.dma_semaphore, #tpu.memory_space<semaphore_mem>>
      %13 = tpu.memref_squeeze %12 : memref<1x!tpu.dma_semaphore, #tpu.memory_space<semaphore_mem>> -> memref<!tpu.dma_semaphore, #tpu.memory_space<semaphore_mem>>
      tpu.enqueue_dma source(%10 : memref<2x16384xf32, #tpu.memory_space<any>>) target(%11 : memref<2x16384xf32, #tpu.memory_space<any>>) target_semaphore(%13 : memref<!tpu.dma_semaphore, #tpu.memory_space<semaphore_mem>>)
      %c2_i32 = arith.constant 2 : i32
      %c0_i32_10 = arith.constant 0 : i32
      %c16384_i32_11 = arith.constant 16384 : i32
      %14 = tpu.memref_slice %arg2[%c0_i32_10, %c16384_i32_11] : memref<2x65536xf32, #tpu.memory_space<any>> -> memref<2x16384xf32, #tpu.memory_space<any>>
      %c0_i32_12 = arith.constant 0 : i32
      %c81920_i32 = arith.constant 81920 : i32
      %15 = tpu.memref_slice %arg4[%c0_i32_12, %c81920_i32] : memref<2x262144xf32, #tpu.memory_space<any>> -> memref<2x16384xf32, #tpu.memory_space<any>>
      %16 = tpu.memref_slice %arg5[%c2_i32] : memref<8x!tpu.dma_semaphore, #tpu.memory_space<semaphore_mem>> -> memref<1x!tpu.dma_semaphore, #tpu.memory_space<semaphore_mem>>
      %17 = tpu.memref_squeeze %16 : memref<1x!tpu.dma_semaphore, #tpu.memory_space<semaphore_mem>> -> memref<!tpu.dma_semaphore, #tpu.memory_space<semaphore_mem>>
      tpu.enqueue_dma source(%14 : memref<2x16384xf32, #tpu.memory_space<any>>) target(%15 : memref<2x16384xf32, #tpu.memory_space<any>>) target_semaphore(%17 : memref<!tpu.dma_semaphore, #tpu.memory_space<semaphore_mem>>)
      %c3_i32 = arith.constant 3 : i32
      %c0_i32_13 = arith.constant 0 : i32
      %c49152_i32_14 = arith.constant 49152 : i32
      %18 = tpu.memref_slice %arg2[%c0_i32_13, %c49152_i32_14] : memref<2x65536xf32, #tpu.memory_space<any>> -> memref<2x16384xf32, #tpu.memory_space<any>>
      %c0_i32_15 = arith.constant 0 : i32
      %c114688_i32 = arith.constant 114688 : i32
      %19 = tpu.memref_slice %arg4[%c0_i32_15, %c114688_i32] : memref<2x262144xf32, #tpu.memory_space<any>> -> memref<2x16384xf32, #tpu.memory_space<any>>
      %20 = tpu.memref_slice %arg5[%c3_i32] : memref<8x!tpu.dma_semaphore, #tpu.memory_space<semaphore_mem>> -> memref<1x!tpu.dma_semaphore, #tpu.memory_space<semaphore_mem>>
      %21 = tpu.memref_squeeze %20 : memref<1x!tpu.dma_semaphore, #tpu.memory_space<semaphore_mem>> -> memref<!tpu.dma_semaphore, #tpu.memory_space<semaphore_mem>>
      tpu.enqueue_dma source(%18 : memref<2x16384xf32, #tpu.memory_space<any>>) target(%19 : memref<2x16384xf32, #tpu.memory_space<any>>) target_semaphore(%21 : memref<!tpu.dma_semaphore, #tpu.memory_space<semaphore_mem>>)
      %c4_i32 = arith.constant 4 : i32
      %c0_i32_16 = arith.constant 0 : i32
      %c16384_i32_17 = arith.constant 16384 : i32
      %22 = tpu.memref_slice %arg3[%c0_i32_16, %c16384_i32_17] : memref<2x131072xf32, #tpu.memory_space<any>> -> memref<2x16384xf32, #tpu.memory_space<any>>
      %c0_i32_18 = arith.constant 0 : i32
      %c147456_i32 = arith.constant 147456 : i32
      %23 = tpu.memref_slice %arg4[%c0_i32_18, %c147456_i32] : memref<2x262144xf32, #tpu.memory_space<any>> -> memref<2x16384xf32, #tpu.memory_space<any>>
      %24 = tpu.memref_slice %arg5[%c4_i32] : memref<8x!tpu.dma_semaphore, #tpu.memory_space<semaphore_mem>> -> memref<1x!tpu.dma_semaphore, #tpu.memory_space<semaphore_mem>>
      %25 = tpu.memref_squeeze %24 : memref<1x!tpu.dma_semaphore, #tpu.memory_space<semaphore_mem>> -> memref<!tpu.dma_semaphore, #tpu.memory_space<semaphore_mem>>
      tpu.enqueue_dma source(%22 : memref<2x16384xf32, #tpu.memory_space<any>>) target(%23 : memref<2x16384xf32, #tpu.memory_space<any>>) target_semaphore(%25 : memref<!tpu.dma_semaphore, #tpu.memory_space<semaphore_mem>>)
      %c5_i32 = arith.constant 5 : i32
      %c0_i32_19 = arith.constant 0 : i32
      %c49152_i32_20 = arith.constant 49152 : i32
      %26 = tpu.memref_slice %arg3[%c0_i32_19, %c49152_i32_20] : memref<2x131072xf32, #tpu.memory_space<any>> -> memref<2x16384xf32, #tpu.memory_space<any>>
      %c0_i32_21 = arith.constant 0 : i32
      %c180224_i32 = arith.constant 180224 : i32
      %27 = tpu.memref_slice %arg4[%c0_i32_21, %c180224_i32] : memref<2x262144xf32, #tpu.memory_space<any>> -> memref<2x16384xf32, #tpu.memory_space<any>>
      %28 = tpu.memref_slice %arg5[%c5_i32] : memref<8x!tpu.dma_semaphore, #tpu.memory_space<semaphore_mem>> -> memref<1x!tpu.dma_semaphore, #tpu.memory_space<semaphore_mem>>
      %29 = tpu.memref_squeeze %28 : memref<1x!tpu.dma_semaphore, #tpu.memory_space<semaphore_mem>> -> memref<!tpu.dma_semaphore, #tpu.memory_space<semaphore_mem>>
      tpu.enqueue_dma source(%26 : memref<2x16384xf32, #tpu.memory_space<any>>) target(%27 : memref<2x16384xf32, #tpu.memory_space<any>>) target_semaphore(%29 : memref<!tpu.dma_semaphore, #tpu.memory_space<semaphore_mem>>)
      %c6_i32 = arith.constant 6 : i32
      %c0_i32_22 = arith.constant 0 : i32
      %c81920_i32_23 = arith.constant 81920 : i32
      %30 = tpu.memref_slice %arg3[%c0_i32_22, %c81920_i32_23] : memref<2x131072xf32, #tpu.memory_space<any>> -> memref<2x16384xf32, #tpu.memory_space<any>>
      %c0_i32_24 = arith.constant 0 : i32
      %c212992_i32 = arith.constant 212992 : i32
      %31 = tpu.memref_slice %arg4[%c0_i32_24, %c212992_i32] : memref<2x262144xf32, #tpu.memory_space<any>> -> memref<2x16384xf32, #tpu.memory_space<any>>
      %32 = tpu.memref_slice %arg5[%c6_i32] : memref<8x!tpu.dma_semaphore, #tpu.memory_space<semaphore_mem>> -> memref<1x!tpu.dma_semaphore, #tpu.memory_space<semaphore_mem>>
      %33 = tpu.memref_squeeze %32 : memref<1x!tpu.dma_semaphore, #tpu.memory_space<semaphore_mem>> -> memref<!tpu.dma_semaphore, #tpu.memory_space<semaphore_mem>>
      tpu.enqueue_dma source(%30 : memref<2x16384xf32, #tpu.memory_space<any>>) target(%31 : memref<2x16384xf32, #tpu.memory_space<any>>) target_semaphore(%33 : memref<!tpu.dma_semaphore, #tpu.memory_space<semaphore_mem>>)
      %c7_i32 = arith.constant 7 : i32
      %c0_i32_25 = arith.constant 0 : i32
      %c114688_i32_26 = arith.constant 114688 : i32
      %34 = tpu.memref_slice %arg3[%c0_i32_25, %c114688_i32_26] : memref<2x131072xf32, #tpu.memory_space<any>> -> memref<2x16384xf32, #tpu.memory_space<any>>
      %c0_i32_27 = arith.constant 0 : i32
      %c245760_i32 = arith.constant 245760 : i32
      %35 = tpu.memref_slice %arg4[%c0_i32_27, %c245760_i32] : memref<2x262144xf32, #tpu.memory_space<any>> -> memref<2x16384xf32, #tpu.memory_space<any>>
      %36 = tpu.memref_slice %arg5[%c7_i32] : memref<8x!tpu.dma_semaphore, #tpu.memory_space<semaphore_mem>> -> memref<1x!tpu.dma_semaphore, #tpu.memory_space<semaphore_mem>>
      %37 = tpu.memref_squeeze %36 : memref<1x!tpu.dma_semaphore, #tpu.memory_space<semaphore_mem>> -> memref<!tpu.dma_semaphore, #tpu.memory_space<semaphore_mem>>
      tpu.enqueue_dma source(%34 : memref<2x16384xf32, #tpu.memory_space<any>>) target(%35 : memref<2x16384xf32, #tpu.memory_space<any>>) target_semaphore(%37 : memref<!tpu.dma_semaphore, #tpu.memory_space<semaphore_mem>>)
      %c0_i32_28 = arith.constant 0 : i32
      %c0_i32_29 = arith.constant 0 : i32
      %c16384_i32_30 = arith.constant 16384 : i32
      %38 = tpu.memref_slice %arg1[%c0_i32_29, %c16384_i32_30] : memref<2x65536xf32, #tpu.memory_space<any>> -> memref<2x16384xf32, #tpu.memory_space<any>>
      %c0_i32_31 = arith.constant 0 : i32
      %c16384_i32_32 = arith.constant 16384 : i32
      %39 = tpu.memref_slice %arg4[%c0_i32_31, %c16384_i32_32] : memref<2x262144xf32, #tpu.memory_space<any>> -> memref<2x16384xf32, #tpu.memory_space<any>>
      %40 = tpu.memref_slice %arg5[%c0_i32_28] : memref<8x!tpu.dma_semaphore, #tpu.memory_space<semaphore_mem>> -> memref<1x!tpu.dma_semaphore, #tpu.memory_space<semaphore_mem>>
      %41 = tpu.memref_squeeze %40 : memref<1x!tpu.dma_semaphore, #tpu.memory_space<semaphore_mem>> -> memref<!tpu.dma_semaphore, #tpu.memory_space<semaphore_mem>>
      tpu.wait_dma2 semaphore(%41 : memref<!tpu.dma_semaphore, #tpu.memory_space<semaphore_mem>>) src(%38 : memref<2x16384xf32, #tpu.memory_space<any>>) dst(%39 : memref<2x16384xf32, #tpu.memory_space<any>>)
      %c1_i32_33 = arith.constant 1 : i32
      %c0_i32_34 = arith.constant 0 : i32
      %c49152_i32_35 = arith.constant 49152 : i32
      %42 = tpu.memref_slice %arg1[%c0_i32_34, %c49152_i32_35] : memref<2x65536xf32, #tpu.memory_space<any>> -> memref<2x16384xf32, #tpu.memory_space<any>>
      %c0_i32_36 = arith.constant 0 : i32
      %c49152_i32_37 = arith.constant 49152 : i32
      %43 = tpu.memref_slice %arg4[%c0_i32_36, %c49152_i32_37] : memref<2x262144xf32, #tpu.memory_space<any>> -> memref<2x16384xf32, #tpu.memory_space<any>>
      %44 = tpu.memref_slice %arg5[%c1_i32_33] : memref<8x!tpu.dma_semaphore, #tpu.memory_space<semaphore_mem>> -> memref<1x!tpu.dma_semaphore, #tpu.memory_space<semaphore_mem>>
      %45 = tpu.memref_squeeze %44 : memref<1x!tpu.dma_semaphore, #tpu.memory_space<semaphore_mem>> -> memref<!tpu.dma_semaphore, #tpu.memory_space<semaphore_mem>>
      tpu.wait_dma2 semaphore(%45 : memref<!tpu.dma_semaphore, #tpu.memory_space<semaphore_mem>>) src(%42 : memref<2x16384xf32, #tpu.memory_space<any>>) dst(%43 : memref<2x16384xf32, #tpu.memory_space<any>>)
      %c2_i32_38 = arith.constant 2 : i32
      %c0_i32_39 = arith.constant 0 : i32
      %c16384_i32_40 = arith.constant 16384 : i32
      %46 = tpu.memref_slice %arg2[%c0_i32_39, %c16384_i32_40] : memref<2x65536xf32, #tpu.memory_space<any>> -> memref<2x16384xf32, #tpu.memory_space<any>>
      %c0_i32_41 = arith.constant 0 : i32
      %c81920_i32_42 = arith.constant 81920 : i32
      %47 = tpu.memref_slice %arg4[%c0_i32_41, %c81920_i32_42] : memref<2x262144xf32, #tpu.memory_space<any>> -> memref<2x16384xf32, #tpu.memory_space<any>>
      %48 = tpu.memref_slice %arg5[%c2_i32_38] : memref<8x!tpu.dma_semaphore, #tpu.memory_space<semaphore_mem>> -> memref<1x!tpu.dma_semaphore, #tpu.memory_space<semaphore_mem>>
      %49 = tpu.memref_squeeze %48 : memref<1x!tpu.dma_semaphore, #tpu.memory_space<semaphore_mem>> -> memref<!tpu.dma_semaphore, #tpu.memory_space<semaphore_mem>>
      tpu.wait_dma2 semaphore(%49 : memref<!tpu.dma_semaphore, #tpu.memory_space<semaphore_mem>>) src(%46 : memref<2x16384xf32, #tpu.memory_space<any>>) dst(%47 : memref<2x16384xf32, #tpu.memory_space<any>>)
      %c3_i32_43 = arith.constant 3 : i32
      %c0_i32_44 = arith.constant 0 : i32
      %c49152_i32_45 = arith.constant 49152 : i32
      %50 = tpu.memref_slice %arg2[%c0_i32_44, %c49152_i32_45] : memref<2x65536xf32, #tpu.memory_space<any>> -> memref<2x16384xf32, #tpu.memory_space<any>>
      %c0_i32_46 = arith.constant 0 : i32
      %c114688_i32_47 = arith.constant 114688 : i32
      %51 = tpu.memref_slice %arg4[%c0_i32_46, %c114688_i32_47] : memref<2x262144xf32, #tpu.memory_space<any>> -> memref<2x16384xf32, #tpu.memory_space<any>>
      %52 = tpu.memref_slice %arg5[%c3_i32_43] : memref<8x!tpu.dma_semaphore, #tpu.memory_space<semaphore_mem>> -> memref<1x!tpu.dma_semaphore, #tpu.memory_space<semaphore_mem>>
      %53 = tpu.memref_squeeze %52 : memref<1x!tpu.dma_semaphore, #tpu.memory_space<semaphore_mem>> -> memref<!tpu.dma_semaphore, #tpu.memory_space<semaphore_mem>>
      tpu.wait_dma2 semaphore(%53 : memref<!tpu.dma_semaphore, #tpu.memory_space<semaphore_mem>>) src(%50 : memref<2x16384xf32, #tpu.memory_space<any>>) dst(%51 : memref<2x16384xf32, #tpu.memory_space<any>>)
      %c4_i32_48 = arith.constant 4 : i32
      %c0_i32_49 = arith.constant 0 : i32
      %c16384_i32_50 = arith.constant 16384 : i32
      %54 = tpu.memref_slice %arg3[%c0_i32_49, %c16384_i32_50] : memref<2x131072xf32, #tpu.memory_space<any>> -> memref<2x16384xf32, #tpu.memory_space<any>>
      %c0_i32_51 = arith.constant 0 : i32
      %c147456_i32_52 = arith.constant 147456 : i32
      %55 = tpu.memref_slice %arg4[%c0_i32_51, %c147456_i32_52] : memref<2x262144xf32, #tpu.memory_space<any>> -> memref<2x16384xf32, #tpu.memory_space<any>>
      %56 = tpu.memref_slice %arg5[%c4_i32_48] : memref<8x!tpu.dma_semaphore, #tpu.memory_space<semaphore_mem>> -> memref<1x!tpu.dma_semaphore, #tpu.memory_space<semaphore_mem>>
      %57 = tpu.memref_squeeze %56 : memref<1x!tpu.dma_semaphore, #tpu.memory_space<semaphore_mem>> -> memref<!tpu.dma_semaphore, #tpu.memory_space<semaphore_mem>>
      tpu.wait_dma2 semaphore(%57 : memref<!tpu.dma_semaphore, #tpu.memory_space<semaphore_mem>>) src(%54 : memref<2x16384xf32, #tpu.memory_space<any>>) dst(%55 : memref<2x16384xf32, #tpu.memory_space<any>>)
      %c5_i32_53 = arith.constant 5 : i32
      %c0_i32_54 = arith.constant 0 : i32
      %c49152_i32_55 = arith.constant 49152 : i32
      %58 = tpu.memref_slice %arg3[%c0_i32_54, %c49152_i32_55] : memref<2x131072xf32, #tpu.memory_space<any>> -> memref<2x16384xf32, #tpu.memory_space<any>>
      %c0_i32_56 = arith.constant 0 : i32
      %c180224_i32_57 = arith.constant 180224 : i32
      %59 = tpu.memref_slice %arg4[%c0_i32_56, %c180224_i32_57] : memref<2x262144xf32, #tpu.memory_space<any>> -> memref<2x16384xf32, #tpu.memory_space<any>>
      %60 = tpu.memref_slice %arg5[%c5_i32_53] : memref<8x!tpu.dma_semaphore, #tpu.memory_space<semaphore_mem>> -> memref<1x!tpu.dma_semaphore, #tpu.memory_space<semaphore_mem>>
      %61 = tpu.memref_squeeze %60 : memref<1x!tpu.dma_semaphore, #tpu.memory_space<semaphore_mem>> -> memref<!tpu.dma_semaphore, #tpu.memory_space<semaphore_mem>>
      tpu.wait_dma2 semaphore(%61 : memref<!tpu.dma_semaphore, #tpu.memory_space<semaphore_mem>>) src(%58 : memref<2x16384xf32, #tpu.memory_space<any>>) dst(%59 : memref<2x16384xf32, #tpu.memory_space<any>>)
      %c6_i32_58 = arith.constant 6 : i32
      %c0_i32_59 = arith.constant 0 : i32
      %c81920_i32_60 = arith.constant 81920 : i32
      %62 = tpu.memref_slice %arg3[%c0_i32_59, %c81920_i32_60] : memref<2x131072xf32, #tpu.memory_space<any>> -> memref<2x16384xf32, #tpu.memory_space<any>>
      %c0_i32_61 = arith.constant 0 : i32
      %c212992_i32_62 = arith.constant 212992 : i32
      %63 = tpu.memref_slice %arg4[%c0_i32_61, %c212992_i32_62] : memref<2x262144xf32, #tpu.memory_space<any>> -> memref<2x16384xf32, #tpu.memory_space<any>>
      %64 = tpu.memref_slice %arg5[%c6_i32_58] : memref<8x!tpu.dma_semaphore, #tpu.memory_space<semaphore_mem>> -> memref<1x!tpu.dma_semaphore, #tpu.memory_space<semaphore_mem>>
      %65 = tpu.memref_squeeze %64 : memref<1x!tpu.dma_semaphore, #tpu.memory_space<semaphore_mem>> -> memref<!tpu.dma_semaphore, #tpu.memory_space<semaphore_mem>>
      tpu.wait_dma2 semaphore(%65 : memref<!tpu.dma_semaphore, #tpu.memory_space<semaphore_mem>>) src(%62 : memref<2x16384xf32, #tpu.memory_space<any>>) dst(%63 : memref<2x16384xf32, #tpu.memory_space<any>>)
      %c7_i32_63 = arith.constant 7 : i32
      %c0_i32_64 = arith.constant 0 : i32
      %c114688_i32_65 = arith.constant 114688 : i32
      %66 = tpu.memref_slice %arg3[%c0_i32_64, %c114688_i32_65] : memref<2x131072xf32, #tpu.memory_space<any>> -> memref<2x16384xf32, #tpu.memory_space<any>>
      %c0_i32_66 = arith.constant 0 : i32
      %c245760_i32_67 = arith.constant 245760 : i32
      %67 = tpu.memref_slice %arg4[%c0_i32_66, %c245760_i32_67] : memref<2x262144xf32, #tpu.memory_space<any>> -> memref<2x16384xf32, #tpu.memory_space<any>>
      %68 = tpu.memref_slice %arg5[%c7_i32_63] : memref<8x!tpu.dma_semaphore, #tpu.memory_space<semaphore_mem>> -> memref<1x!tpu.dma_semaphore, #tpu.memory_space<semaphore_mem>>
      %69 = tpu.memref_squeeze %68 : memref<1x!tpu.dma_semaphore, #tpu.memory_space<semaphore_mem>> -> memref<!tpu.dma_semaphore, #tpu.memory_space<semaphore_mem>>
      tpu.wait_dma2 semaphore(%69 : memref<!tpu.dma_semaphore, #tpu.memory_space<semaphore_mem>>) src(%66 : memref<2x16384xf32, #tpu.memory_space<any>>) dst(%67 : memref<2x16384xf32, #tpu.memory_space<any>>)
    } else {
    }
    return
  }
}

</mosaic_0001>

<llo_original>
// kernel: tpu_custom_call.1
$region0: #{tpu_custom_call.1}
  #allocation0 [shape = 'u32[]', space=smem, size = 0x4, offset = 0x4, fixed_abs, tag = 'smem constant byte address 0x4 - core index']
  #allocation1 [shape = 'u32[144,128]{1,0:T(1,128)}', space=vmem, size = 0x12000, scoped, tag = 'internal scratch']
  #allocation2 [shape = 's32[8]{0}', space=sflag, size = 0x20, scoped, tag = 'scratch operand']
  #allocation3 [shape = 's32[]', space=sflag, size = 0x4, offset = 0, fixed_abs, tag = 'sflag constant byte address 0x0 - dummy sync flag']
  #allocation4 [shape = 'u32[0]{0}', space=smem, size = 0, offset = 0, fixed_abs, tag = 'smem constant byte address 0x0 - null']
  #allocation5 [shape = 's32[]', space=sflag, size = 0x4, offset = 0, fixed_abs, tag = 'sflag constant byte address 0x0 - dummy sync flag']
  #allocation6 [shape = 'u32[0]{0}', space=smem, size = 0, offset = 0, fixed_abs, tag = 'smem constant byte address 0x0 - null']
  #allocation7 [shape = 's32[]', space=sflag, size = 0x4, offset = 0, fixed_abs, tag = 'sflag constant byte address 0x0 - dummy sync flag']
  #allocation8 [shape = 'u32[0]{0}', space=smem, size = 0, offset = 0, fixed_abs, tag = 'smem constant byte address 0x0 - null']
  #allocation9 [shape = 's32[]', space=sflag, size = 0x4, offset = 0, fixed_abs, tag = 'sflag constant byte address 0x0 - dummy sync flag']
  #allocation10 [shape = 'u32[0]{0}', space=smem, size = 0, offset = 0, fixed_abs, tag = 'smem constant byte address 0x0 - null']
  #allocation11 [shape = 's32[]', space=sflag, size = 0x4, offset = 0, fixed_abs, tag = 'sflag constant byte address 0x0 - dummy sync flag']
  #allocation12 [shape = 'u32[0]{0}', space=smem, size = 0, offset = 0, fixed_abs, tag = 'smem constant byte address 0x0 - null']
  #allocation13 [shape = 's32[]', space=sflag, size = 0x4, offset = 0, fixed_abs, tag = 'sflag constant byte address 0x0 - dummy sync flag']
  #allocation14 [shape = 'u32[0]{0}', space=smem, size = 0, offset = 0, fixed_abs, tag = 'smem constant byte address 0x0 - null']
  #allocation15 [shape = 's32[]', space=sflag, size = 0x4, offset = 0, fixed_abs, tag = 'sflag constant byte address 0x0 - dummy sync flag']
  #allocation16 [shape = 'u32[0]{0}', space=smem, size = 0, offset = 0, fixed_abs, tag = 'smem constant byte address 0x0 - null']
  #allocation17 [shape = 's32[]', space=sflag, size = 0x4, offset = 0, fixed_abs, tag = 'sflag constant byte address 0x0 - dummy sync flag']
  #allocation18 [shape = 'u32[0]{0}', space=smem, size = 0, offset = 0, fixed_abs, tag = 'smem constant byte address 0x0 - null']
  #allocation19 [shape = 's32[]', space=sflag, size = 0x4, offset = 0, fixed_abs, tag = 'sflag constant byte address 0x0 - dummy sync flag']
  #allocation20 [shape = 'u32[0]{0}', space=smem, size = 0, offset = 0, fixed_abs, tag = 'smem constant byte address 0x0 - null']
  #allocation21 [shape = 's32[]', space=sflag, size = 0x4, offset = 0, fixed_abs, tag = 'sflag constant byte address 0x0 - dummy sync flag']
  #allocation22 [shape = 'u32[0]{0}', space=smem, size = 0, offset = 0, fixed_abs, tag = 'smem constant byte address 0x0 - null']
  #allocation23 [shape = 's32[]', space=sflag, size = 0x4, offset = 0, fixed_abs, tag = 'sflag constant byte address 0x0 - dummy sync flag']
  #allocation24 [shape = 'u32[0]{0}', space=smem, size = 0, offset = 0, fixed_abs, tag = 'smem constant byte address 0x0 - null']
  #allocation25 [shape = 's32[]', space=sflag, size = 0x4, offset = 0, fixed_abs, tag = 'sflag constant byte address 0x0 - dummy sync flag']
  #allocation26 [shape = 'u32[0]{0}', space=smem, size = 0, offset = 0, fixed_abs, tag = 'smem constant byte address 0x0 - null']
  #allocation27 [shape = 's32[]', space=sflag, size = 0x4, offset = 0, fixed_abs, tag = 'sflag constant byte address 0x0 - dummy sync flag']
  #allocation28 [shape = 'u32[0]{0}', space=smem, size = 0, offset = 0, fixed_abs, tag = 'smem constant byte address 0x0 - null']
  #allocation29 [shape = 's32[]', space=sflag, size = 0x4, offset = 0, fixed_abs, tag = 'sflag constant byte address 0x0 - dummy sync flag']
  #allocation30 [shape = 'u32[0]{0}', space=smem, size = 0, offset = 0, fixed_abs, tag = 'smem constant byte address 0x0 - null']
  #allocation31 [shape = 's32[]', space=sflag, size = 0x4, offset = 0, fixed_abs, tag = 'sflag constant byte address 0x0 - dummy sync flag']
  #allocation32 [shape = 'u32[0]{0}', space=smem, size = 0, offset = 0, fixed_abs, tag = 'smem constant byte address 0x0 - null']
  #allocation33 [shape = 's32[]', space=sflag, size = 0x4, offset = 0, fixed_abs, tag = 'sflag constant byte address 0x0 - dummy sync flag']
  #allocation34 [shape = 'u32[0]{0}', space=smem, size = 0, offset = 0, fixed_abs, tag = 'smem constant byte address 0x0 - null']
  %s0 = inlined_call_operand.hbm [shape: f32[2,65536], index: 0, kind: input, shape index: {}]
  %s1 = inlined_call_operand.hbm [shape: f32[2,65536], index: 1, kind: input, shape index: {}]
  %s2 = inlined_call_operand.hbm [shape: f32[2,131072], index: 2, kind: input, shape index: {}]
  %s3 = inlined_call_operand.hbm [shape: f32[2,262144], index: 3, kind: output, shape index: {}]
  %s4 = sld [smem:[#allocation0]]
  $region17: #{tpu_custom_call.1} parent=0
    _
  %s6 = ssub.s32 1, %s4
  %s7 = scalar_select 0, %s6, %s4
  loop: start=0, step=1, limit=2
  $region2: #{tpu_custom_call.1} parent=0 // loop_pre_header
    _
  $region3: #{tpu_custom_call.1} parent=0 // loop_header
    %s9 = sphi 0, %s13
    %p10 = scmp.ge.s32.totalorder %s9, 2
  $region4: #{tpu_custom_call.1} parent=0 // loop_header_branch
    %12 = sbr.rel (%p10) target = $region8
  $region5: #{tpu_custom_call.1} parent=0 // loop_body
    %s14 = sadd.s32 %s9, 1
    %p15 = scmp.eq.s32.totalorder %s9, 0
    // Predicated region
    $region9: #{tpu_custom_call.1} parent=5 // pred_check
      %p16 = pneg %p15
    $region10: #{tpu_custom_call.1} parent=5 // pred_check_branch
      %18 = sbr.rel (%p16) target = $region12
    $region11: #{tpu_custom_call.1} parent=5 // pred_region
      %s20 = sshll.u32 1, 14
      %s21 = sxor.u32 4294967295, %s20
      %s24 = sshll.u32 3, 24
      %s25 = sxor.u32 4294967295, %s24
      %s26 = sand.u32 0, %s25
      %s28 = sor.u32 %s26, 0
      %31 = dma.general %s0, 4096, %s3, [#allocation2], [#allocation3], [#allocation4], %s28, 0
      %s32 = scalar_lea.hbm %s0, 8192
      %s33 = scalar_lea.hbm %s3, 8192
      %s34 = scalar_lea.sflag [#allocation2], 1
      %s36 = sshll.u32 1, 14
      %s37 = sxor.u32 4294967295, %s36
      %s40 = sshll.u32 3, 24
      %s41 = sxor.u32 4294967295, %s40
      %s42 = sand.u32 0, %s41
      %s44 = sor.u32 %s42, 0
      %47 = dma.general %s32, 4096, %s33, %s34, [#allocation5], [#allocation6], %s44, 0
      %s48 = scalar_lea.hbm %s3, 16384
      %s49 = scalar_lea.sflag [#allocation2], 2
      %s51 = sshll.u32 1, 14
      %s52 = sxor.u32 4294967295, %s51
      %s55 = sshll.u32 3, 24
      %s56 = sxor.u32 4294967295, %s55
      %s57 = sand.u32 0, %s56
      %s59 = sor.u32 %s57, 0
      %62 = dma.general %s1, 4096, %s48, %s49, [#allocation7], [#allocation8], %s59, 0
      %s63 = scalar_lea.hbm %s1, 8192
      %s64 = scalar_lea.hbm %s3, 24576
      %s65 = scalar_lea.sflag [#allocation2], 3
      %s67 = sshll.u32 1, 14
      %s68 = sxor.u32 4294967295, %s67
      %s71 = sshll.u32 3, 24
      %s72 = sxor.u32 4294967295, %s71
      %s73 = sand.u32 0, %s72
      %s75 = sor.u32 %s73, 0
      %78 = dma.general %s63, 4096, %s64, %s65, [#allocation9], [#allocation10], %s75, 0
      %s79 = scalar_lea.hbm %s3, 32768
      %s80 = scalar_lea.sflag [#allocation2], 4
      %s82 = sshll.u32 1, 14
      %s83 = sxor.u32 4294967295, %s82
      %s86 = sshll.u32 3, 24
      %s87 = sxor.u32 4294967295, %s86
      %s88 = sand.u32 0, %s87
      %s90 = sor.u32 %s88, 0
      %93 = dma.general %s2, 4096, %s79, %s80, [#allocation11], [#allocation12], %s90, 0
      %s94 = scalar_lea.hbm %s2, 8192
      %s95 = scalar_lea.hbm %s3, 40960
      %s96 = scalar_lea.sflag [#allocation2], 5
      %s98 = sshll.u32 1, 14
      %s99 = sxor.u32 4294967295, %s98
      %s102 = sshll.u32 3, 24
      %s103 = sxor.u32 4294967295, %s102
      %s104 = sand.u32 0, %s103
      %s106 = sor.u32 %s104, 0
      %109 = dma.general %s94, 4096, %s95, %s96, [#allocation13], [#allocation14], %s106, 0
      %s110 = scalar_lea.hbm %s2, 16384
      %s111 = scalar_lea.hbm %s3, 49152
      %s112 = scalar_lea.sflag [#allocation2], 6
      %s114 = sshll.u32 1, 14
      %s115 = sxor.u32 4294967295, %s114
      %s118 = sshll.u32 3, 24
      %s119 = sxor.u32 4294967295, %s118
      %s120 = sand.u32 0, %s119
      %s122 = sor.u32 %s120, 0
      %125 = dma.general %s110, 4096, %s111, %s112, [#allocation15], [#allocation16], %s122, 0
      %s126 = scalar_lea.hbm %s2, 24576
      %s127 = scalar_lea.hbm %s3, 57344
      %s128 = scalar_lea.sflag [#allocation2], 7
      %s130 = sshll.u32 1, 14
      %s131 = sxor.u32 4294967295, %s130
      %s134 = sshll.u32 3, 24
      %s135 = sxor.u32 4294967295, %s134
      %s136 = sand.u32 0, %s135
      %s138 = sor.u32 %s136, 0
      %141 = dma.general %s126, 4096, %s127, %s128, [#allocation17], [#allocation18], %s138, 0
      %s142 = smul.u32 2, 1
      %s143 = smul.u32 %s142, 128
      %s144 = sshll.u32 %s143, 4
      %145 = dma.done [#allocation2], %s144
      %s146 = sshll.u32 %s143, 4
      %147 = dma.done %s34, %s146
      %s148 = sshll.u32 %s143, 4
      %149 = dma.done %s49, %s148
      %s150 = sshll.u32 %s143, 4
      %151 = dma.done %s65, %s150
      %s152 = sshll.u32 %s143, 4
      %153 = dma.done %s80, %s152
      %s154 = sshll.u32 %s143, 4
      %155 = dma.done %s96, %s154
      %s156 = sshll.u32 %s143, 4
      %157 = dma.done %s112, %s156
      %s158 = sshll.u32 %s143, 4
      %159 = dma.done %s128, %s158
    $region12: #{tpu_custom_call.1} parent=5 // pred_fallthru
      _
    %p160 = scmp.eq.s32.totalorder %s9, 1
    // Predicated region
    $region13: #{tpu_custom_call.1} parent=5 // pred_check
      %p161 = pneg %p160
    $region14: #{tpu_custom_call.1} parent=5 // pred_check_branch
      %163 = sbr.rel (%p161) target = $region16
    $region15: #{tpu_custom_call.1} parent=5 // pred_region
      %s164 = scalar_lea.hbm %s0, 4096
      %s165 = scalar_lea.hbm %s3, 4096
      %s167 = sshll.u32 1, 14
      %s168 = sxor.u32 4294967295, %s167
      %s171 = sshll.u32 3, 24
      %s172 = sxor.u32 4294967295, %s171
      %s173 = sand.u32 0, %s172
      %s175 = sor.u32 %s173, 0
      %178 = dma.general %s164, 4096, %s165, [#allocation2], [#allocation19], [#allocation20], %s175, 0
      %s179 = scalar_lea.hbm %s0, 12288
      %s180 = scalar_lea.hbm %s3, 12288
      %s181 = scalar_lea.sflag [#allocation2], 1
      %s183 = sshll.u32 1, 14
      %s184 = sxor.u32 4294967295, %s183
      %s187 = sshll.u32 3, 24
      %s188 = sxor.u32 4294967295, %s187
      %s189 = sand.u32 0, %s188
      %s191 = sor.u32 %s189, 0
      %194 = dma.general %s179, 4096, %s180, %s181, [#allocation21], [#allocation22], %s191, 0
      %s195 = scalar_lea.hbm %s1, 4096
      %s196 = scalar_lea.hbm %s3, 20480
      %s197 = scalar_lea.sflag [#allocation2], 2
      %s199 = sshll.u32 1, 14
      %s200 = sxor.u32 4294967295, %s199
      %s203 = sshll.u32 3, 24
      %s204 = sxor.u32 4294967295, %s203
      %s205 = sand.u32 0, %s204
      %s207 = sor.u32 %s205, 0
      %210 = dma.general %s195, 4096, %s196, %s197, [#allocation23], [#allocation24], %s207, 0
      %s211 = scalar_lea.hbm %s1, 12288
      %s212 = scalar_lea.hbm %s3, 28672
      %s213 = scalar_lea.sflag [#allocation2], 3
      %s215 = sshll.u32 1, 14
      %s216 = sxor.u32 4294967295, %s215
      %s219 = sshll.u32 3, 24
      %s220 = sxor.u32 4294967295, %s219
      %s221 = sand.u32 0, %s220
      %s223 = sor.u32 %s221, 0
      %226 = dma.general %s211, 4096, %s212, %s213, [#allocation25], [#allocation26], %s223, 0
      %s227 = scalar_lea.hbm %s2, 4096
      %s228 = scalar_lea.hbm %s3, 36864
      %s229 = scalar_lea.sflag [#allocation2], 4
      %s231 = sshll.u32 1, 14
      %s232 = sxor.u32 4294967295, %s231
      %s235 = sshll.u32 3, 24
      %s236 = sxor.u32 4294967295, %s235
      %s237 = sand.u32 0, %s236
      %s239 = sor.u32 %s237, 0
      %242 = dma.general %s227, 4096, %s228, %s229, [#allocation27], [#allocation28], %s239, 0
      %s243 = scalar_lea.hbm %s2, 12288
      %s244 = scalar_lea.hbm %s3, 45056
      %s245 = scalar_lea.sflag [#allocation2], 5
      %s247 = sshll.u32 1, 14
      %s248 = sxor.u32 4294967295, %s247
      %s251 = sshll.u32 3, 24
      %s252 = sxor.u32 4294967295, %s251
      %s253 = sand.u32 0, %s252
      %s255 = sor.u32 %s253, 0
      %258 = dma.general %s243, 4096, %s244, %s245, [#allocation29], [#allocation30], %s255, 0
      %s259 = scalar_lea.hbm %s2, 20480
      %s260 = scalar_lea.hbm %s3, 53248
      %s261 = scalar_lea.sflag [#allocation2], 6
      %s263 = sshll.u32 1, 14
      %s264 = sxor.u32 4294967295, %s263
      %s267 = sshll.u32 3, 24
      %s268 = sxor.u32 4294967295, %s267
      %s269 = sand.u32 0, %s268
      %s271 = sor.u32 %s269, 0
      %274 = dma.general %s259, 4096, %s260, %s261, [#allocation31], [#allocation32], %s271, 0
      %s275 = scalar_lea.hbm %s2, 28672
      %s276 = scalar_lea.hbm %s3, 61440
      %s277 = scalar_lea.sflag [#allocation2], 7
      %s279 = sshll.u32 1, 14
      %s280 = sxor.u32 4294967295, %s279
      %s283 = sshll.u32 3, 24
      %s284 = sxor.u32 4294967295, %s283
      %s285 = sand.u32 0, %s284
      %s287 = sor.u32 %s285, 0
      %290 = dma.general %s275, 4096, %s276, %s277, [#allocation33], [#allocation34], %s287, 0
      %s291 = smul.u32 2, 1
      %s292 = smul.u32 %s291, 128
      %s293 = sshll.u32 %s292, 4
      %294 = dma.done [#allocation2], %s293
      %s295 = sshll.u32 %s292, 4
      %296 = dma.done %s181, %s295
      %s297 = sshll.u32 %s292, 4
      %298 = dma.done %s197, %s297
      %s299 = sshll.u32 %s292, 4
      %300 = dma.done %s213, %s299
      %s301 = sshll.u32 %s292, 4
      %302 = dma.done %s229, %s301
      %s303 = sshll.u32 %s292, 4
      %304 = dma.done %s245, %s303
      %s305 = sshll.u32 %s292, 4
      %306 = dma.done %s261, %s305
      %s307 = sshll.u32 %s292, 4
      %308 = dma.done %s277, %s307
    $region16: #{tpu_custom_call.1} parent=5 // pred_fallthru
      _
  $region6: #{tpu_custom_call.1} parent=0 // loop_footer
    %s13 = sadd.s32 1, %s9
  $region7: #{tpu_custom_call.1} parent=0 // loop_footer_branch
    %8 = sbr.rel target = $region3
  $region8: #{tpu_custom_call.1} parent=0 // loop_exit
    _
  %309 = vsyncmov [#allocation2]
  %s310 = vpop.sfrf %309
  %p311 = scmp.eq.s32.totalorder %s310, 0
  %p312 = pneg %p311
  %314 = shalt.err (%p312)
  %s315 = scalar_lea.sflag [#allocation2], 1
  %316 = vsyncmov %s315
  %s317 = vpop.sfrf %316
  %p318 = scmp.eq.s32.totalorder %s317, 0
  %p319 = pneg %p318
  %321 = shalt.err (%p319)
  %s322 = scalar_lea.sflag [#allocation2], 2
  %323 = vsyncmov %s322
  %s324 = vpop.sfrf %323
  %p325 = scmp.eq.s32.totalorder %s324, 0
  %p326 = pneg %p325
  %328 = shalt.err (%p326)
  %s329 = scalar_lea.sflag [#allocation2], 3
  %330 = vsyncmov %s329
  %s331 = vpop.sfrf %330
  %p332 = scmp.eq.s32.totalorder %s331, 0
  %p333 = pneg %p332
  %335 = shalt.err (%p333)
  %s336 = scalar_lea.sflag [#allocation2], 4
  %337 = vsyncmov %s336
  %s338 = vpop.sfrf %337
  %p339 = scmp.eq.s32.totalorder %s338, 0
  %p340 = pneg %p339
  %342 = shalt.err (%p340)
  %s343 = scalar_lea.sflag [#allocation2], 5
  %344 = vsyncmov %s343
  %s345 = vpop.sfrf %344
  %p346 = scmp.eq.s32.totalorder %s345, 0
  %p347 = pneg %p346
  %349 = shalt.err (%p347)
  %s350 = scalar_lea.sflag [#allocation2], 6
  %351 = vsyncmov %s350
  %s352 = vpop.sfrf %351
  %p353 = scmp.eq.s32.totalorder %s352, 0
  %p354 = pneg %p353
  %356 = shalt.err (%p354)
  %s357 = scalar_lea.sflag [#allocation2], 7
  %358 = vsyncmov %s357
  %s359 = vpop.sfrf %358
  %p360 = scmp.eq.s32.totalorder %s359, 0
  %p361 = pneg %p360
  %363 = shalt.err (%p361)

</llo_original>
